<compile_context>
chip_gen: v7x
topology: tpu7x:2x2x1
jax: 0.10.0
libtpu: 0.0.40
codegen_flags: <defaults>
</compile_context>

<pallas_src>
import jax
import jax.numpy as jnp
from jax.experimental import pallas as pl
from jax.experimental.pallas import tpu as pltpu


def _largest_divisor_leq(n, cap):
    cap = int(max(1, min(n, cap)))
    for d in range(cap, 0, -1):
        if n % d == 0:
            return d
    return 1


# ---------------------------------------------------------------------------
# Kernel 1: ConvTranspose2d(kernel=2, stride=2).
# Each input pixel independently produces a 2x2 output patch:
#   up[b, 2i+di, 2j+dj, co] = sum_ci x[b,i,j,ci] * W[ci,co,di,dj] + bias[co]
# One MXU matmul per grid cell with all four (di,dj) taps packed into the
# minor dim; result is stored directly in the interleaved output layout.
# ---------------------------------------------------------------------------
def _tconv_kernel(x_ref, w_ref, b_ref, o_ref):
    # x_ref: (1, TH, W, Cin) bf16 ; w_ref: (Cin, 4*Ct) bf16
    # b_ref: (1, 4*Ct) f32        ; o_ref: (1, TH, 2, W, 2*Ct) bf16
    _, th, w, cin = x_ref.shape
    four_ct = w_ref.shape[1]
    half = four_ct // 2
    x2 = x_ref[0].reshape(th * w, cin)          # layout-free when W % 8 == 0
    y = jnp.dot(x2, w_ref[...], preferred_element_type=jnp.float32) + b_ref[...]
    y = y.astype(o_ref.dtype)
    o_ref[0, :, 0, :, :] = y[:, :half].reshape(th, w, half)
    o_ref[0, :, 1, :, :] = y[:, half:].reshape(th, w, half)


def transposed_conv2x2_s2(x_nhwc, w_tconv, bias, *, out_dtype=jnp.bfloat16,
                          vmem_step_budget=12 << 20, row_tile_cap=None):
    """x_nhwc: [B,H,W,Cin] (bf16); w_tconv: PyTorch layout [Cin,Ct,2,2]; bias [Ct]."""
    B, H, W, Cin = x_nhwc.shape
    Ct = int(w_tconv.shape[1])

    # Per-step VMEM estimate -> largest row tile under budget.
    per_row = (2 * W * Cin * 2              # double-buffered input rows (bf16)
               + 2 * 2 * W * 2 * Ct * 2     # double-buffered output rows (bf16)
               + W * 4 * Ct * 4)            # f32 matmul result temp
    const = 2 * Cin * 4 * Ct * 2 + 4 * 4 * Ct
    rows = max(1, (vmem_step_budget - const) // max(per_row, 1))
    if row_tile_cap is not None:
        rows = min(rows, row_tile_cap)
    TH = _largest_divisor_leq(H, rows)
    n_t = H // TH
    vmem_limit = int(min(48 << 20, max(16 << 20, 2 * (const + TH * per_row))))

    # (Cin, Ct, di, dj) -> (Cin, di*2Ct + dj*Ct + co), bf16 for the MXU.
    w_r = jnp.transpose(w_tconv, (0, 2, 3, 1)).reshape(Cin, 4 * Ct)
    w_r = w_r.astype(jnp.bfloat16)
    b_r = jnp.tile(bias.astype(jnp.float32), 4).reshape(1, 4 * Ct)

    out5 = pl.pallas_call(
        _tconv_kernel,
        out_shape=jax.ShapeDtypeStruct((B, H, 2, W, 2 * Ct), out_dtype),
        grid=(B, n_t),
        in_specs=[
            pl.BlockSpec((1, TH, W, Cin), lambda b, t: (b, t, 0, 0)),
            pl.BlockSpec((Cin, 4 * Ct), lambda b, t: (0, 0)),
            pl.BlockSpec((1, 4 * Ct), lambda b, t: (0, 0)),
        ],
        out_specs=pl.BlockSpec((1, TH, 2, W, 2 * Ct),
                               lambda b, t: (b, t, 0, 0, 0)),
        compiler_params=pltpu.CompilerParams(
            dimension_semantics=("parallel", "parallel"),
            vmem_limit_bytes=vmem_limit),
    )(x_nhwc, w_r, b_r)

    # (B, H, 2, W, 2*Ct) and (B, 2H, 2W, Ct) share the same row-major linear
    # order, so this reshape is a free bitcast (no extra HBM pass).
    return out5.reshape(B, 2 * H, 2 * W, Ct)


# ---------------------------------------------------------------------------
# Kernel 2: fused Conv2d(3x3, s=1, p=1, no bias) + folded BatchNorm + ReLU,
# with the channel concat of several input tensors fused in (single staging
# buffer of channel width sum(C_i), full weight per tap).
# Grid = (batch, row-tiles). When the image needs more than one row tile,
# each input is passed three times (main tile + single-row top/bottom halos
# with clamped index maps, masked by pl.when at image borders).
# ---------------------------------------------------------------------------
def _make_conv3x3_kernel(n_imgs, TH, Wc, Cout, Csum, has_halo):
    n_streams = 3 if has_halo else 1

    def kernel(*refs):
        img_refs = refs[:n_streams * n_imgs]
        w_ref, scale_ref, shift_ref, o_ref, xp = refs[n_streams * n_imgs:]

        def cat(vals):
            v = vals[0] if len(vals) == 1 else jnp.concatenate(vals, axis=-1)
            return v.astype(xp.dtype)

        zero_row = jnp.zeros((1, Wc, Csum), xp.dtype)

        # Stage interior rows; the channel concat happens here, in VMEM/vregs.
        xp[1:TH + 1, 1:1 + Wc, :] = cat([img_refs[n_streams * i][0]
                                         for i in range(n_imgs)])

        # Zero only the 1-wide left/right pad columns (not the whole buffer).
        xp[:, 0:1, :] = jnp.zeros((TH + 2, 1, Csum), xp.dtype)
        xp[:, 1 + Wc:2 + Wc, :] = jnp.zeros((TH + 2, 1, Csum), xp.dtype)

        if has_halo:
            t = pl.program_id(1)
            n_t = pl.num_programs(1)

            @pl.when(t > 0)
            def _():
                xp[0:1, 1:1 + Wc, :] = cat([img_refs[n_streams * i + 1][0]
                                            for i in range(n_imgs)])

            @pl.when(t == 0)
            def _():
                xp[0:1, 1:1 + Wc, :] = zero_row

            @pl.when(t < n_t - 1)
            def _():
                xp[TH + 1:TH + 2, 1:1 + Wc, :] = cat(
                    [img_refs[n_streams * i + 2][0] for i in range(n_imgs)])

            @pl.when(t == n_t - 1)
            def _():
                xp[TH + 1:TH + 2, 1:1 + Wc, :] = zero_row
        else:
            xp[0:1, 1:1 + Wc, :] = zero_row
            xp[TH + 1:TH + 2, 1:1 + Wc, :] = zero_row

        # 3x3 conv: 9 taps, one MXU matmul per tap over the full fused channel
        # width K = Csum.  Accumulation is chained in registers and the output
        # is written exactly once (no accumulator-scratch RMWs).
        acc = None
        for dy in range(3):
            for dx in range(3):
                patch = xp[dy:dy + TH, dx:dx + Wc, :]            # (TH, Wc, Csum)
                # reshape is layout-free when Wc % 8 == 0 (typical U-Net widths)
                contrib = jnp.dot(patch.reshape(TH * Wc, Csum),
                                  w_ref[dy * 3 + dx],
                                  preferred_element_type=jnp.float32)
                acc = contrib if acc is None else acc + contrib

        # Folded-BN affine + ReLU epilogue in f32 (VPU), single store.
        y = jnp.maximum(acc * scale_ref[...] + shift_ref[...], 0.0)
        o_ref[0] = y.reshape(TH, Wc, Cout).astype(o_ref.dtype)

    return kernel


def conv3x3_bn_relu_fused(imgs, w_hwio, scale, shift, *, out_dtype=jnp.float32,
                          vmem_step_budget=12 << 20, row_tile_cap=None):
    """ReLU(BN(conv3x3(concat(imgs, axis=-1)))) with the concat fused into the
    kernel (never materialized in HBM). imgs: list of NHWC bf16 arrays sharing
    (B,Hc,Wc); w_hwio: (3,3,sum(C_i),Cout) full conv weight."""
    B, Hc, Wc, _ = imgs[0].shape
    chans = [int(z.shape[-1]) for z in imgs]
    Csum = sum(chans)
    Cout = int(w_hwio.shape[-1])
    n_imgs = len(imgs)
    out_bytes = jnp.dtype(out_dtype).itemsize

    # Per-step VMEM estimate -> largest row tile under budget (fits the 16 MiB
    # v5e scoped default; well under v7x's 64 MiB physical VMEM).
    per_row = (2 * Wc * Csum * 2            # double-buffered input rows (bf16)
               + (Wc + 2) * Csum * 2        # staging row (bf16)
               + 2 * Wc * Cout * out_bytes  # double-buffered output rows
               + Wc * Cout * 4)             # f32 accumulator (vregs / spill)
    const = 2 * 9 * Csum * Cout * 2 + 4 * (Wc + 2) * Csum * 2 + 8 * Cout * 4
    rows = max(1, (vmem_step_budget - const) // max(per_row, 1))
    if row_tile_cap is not None:
        rows = min(rows, row_tile_cap)
    TH = _largest_divisor_leq(Hc, rows)
    n_t = Hc // TH
    has_halo = n_t > 1
    vmem_limit = int(min(48 << 20, max(16 << 20, 2 * (const + (TH + 2) * per_row))))

    in_specs = []
    call_args = []
    for z, c_i in zip(imgs, chans):
        in_specs.append(pl.BlockSpec((1, TH, Wc, c_i), lambda b, t: (b, t, 0, 0)))
        call_args.append(z)
        if has_halo:
            # Single-row top/bottom halos with clamped row index; border rows
            # are replaced by zeros in-kernel via pl.when.
            in_specs.append(pl.BlockSpec(
                (1, 1, Wc, c_i),
                lambda b, t: (b, jnp.maximum(t * TH - 1, 0), 0, 0)))
            in_specs.append(pl.BlockSpec(
                (1, 1, Wc, c_i),
                lambda b, t: (b, jnp.minimum(t * TH + TH, Hc - 1), 0, 0)))
            call_args += [z, z]

    w_r = jnp.asarray(w_hwio, jnp.float32).reshape(9, Csum, Cout)
    w_r = w_r.astype(jnp.bfloat16)
    in_specs += [pl.BlockSpec((9, Csum, Cout), lambda b, t: (0, 0, 0)),
                 pl.BlockSpec((1, Cout), lambda b, t: (0, 0)),
                 pl.BlockSpec((1, Cout), lambda b, t: (0, 0))]
    call_args += [w_r,
                  scale.reshape(1, Cout).astype(jnp.float32),
                  shift.reshape(1, Cout).astype(jnp.float32)]

    kernel = _make_conv3x3_kernel(n_imgs, TH, Wc, Cout, Csum, has_halo)
    return pl.pallas_call(
        kernel,
        out_shape=jax.ShapeDtypeStruct((B, Hc, Wc, Cout), out_dtype),
        grid=(B, n_t),
        in_specs=in_specs,
        out_specs=pl.BlockSpec((1, TH, Wc, Cout), lambda b, t: (b, t, 0, 0)),
        scratch_shapes=[pltpu.VMEM((TH + 2, Wc + 2, Csum), jnp.bfloat16)],
        compiler_params=pltpu.CompilerParams(
            dimension_semantics=("parallel", "parallel"),
            vmem_limit_bytes=vmem_limit),
    )(*call_args)


# ---------------------------------------------------------------------------
# Full TransposeConvBlock forward (NCHW in / NCHW out, like PyTorch).
# ---------------------------------------------------------------------------
def transpose_conv_block_forward(x_nchw, skip_nchw, p, *,
                                 tconv_row_cap=None, conv_row_cap=None):
    # NCHW -> NHWC; the bf16 cast is fused into the transpose copy so the
    # kernels read half the HBM bytes.
    x = jnp.transpose(x_nchw, (0, 2, 3, 1)).astype(jnp.bfloat16)
    skip = jnp.transpose(skip_nchw, (0, 2, 3, 1)).astype(jnp.bfloat16)

    up = transposed_conv2x2_s2(x, p["tconv_w"], p["tconv_b"],
                               row_tile_cap=tconv_row_cap)       # bf16 NHWC

    # conv1 over torch.cat((skip, up), channel) with the concat fused away.
    h = conv3x3_bn_relu_fused([skip, up], p["conv1_w"],
                              p["bn1_scale"], p["bn1_shift"],
                              out_dtype=jnp.bfloat16, row_tile_cap=conv_row_cap)
    h = conv3x3_bn_relu_fused([h], p["conv2_w"],
                              p["bn2_scale"], p["bn2_shift"],
                              out_dtype=jnp.float32, row_tile_cap=conv_row_cap)
    return jnp.transpose(h, (0, 3, 1, 2))          # -> NCHW


# ---------------------------------------------------------------------------
# Pure-JAX f32 reference (no Pallas) for the correctness check.
# ---------------------------------------------------------------------------
def reference_forward(x_nchw, skip_nchw, p):
    x = jnp.transpose(x_nchw, (0, 2, 3, 1))
    skip = jnp.transpose(skip_nchw, (0, 2, 3, 1))

    w = p["tconv_w"]  # [Cin, Ct, 2, 2]
    up = jnp.einsum("bhwc,codx->bhdwxo", x, w)
    B, H, _, W, _, Ct = up.shape
    up = up.reshape(B, 2 * H, 2 * W, Ct) + p["tconv_b"]

    cat = jnp.concatenate([skip, up], axis=-1)

    def cbr(z, w_hwio, scale, shift):
        y = jax.lax.conv_general_dilated(
            z, w_hwio, window_strides=(1, 1), padding=((1, 1), (1, 1)),
            dimension_numbers=("NHWC", "HWIO", "NHWC"))
        return jnp.maximum(y * scale + shift, 0.0)

    h = cbr(cat, p["conv1_w"], p["bn1_scale"], p["bn1_shift"])
    h = cbr(h, p["conv2_w"], p["bn2_scale"], p["bn2_shift"])
    return jnp.transpose(h, (0, 3, 1, 2))


def make_params(key, in_channels, out_channels):
    """Deterministic synthetic parameters matching the PyTorch module's shapes."""
    ks = jax.random.split(key, 12)
    eps = 1e-5

    tconv_w = 0.2 * jax.random.normal(ks[0], (in_channels, out_channels, 2, 2),
                                      jnp.float32)
    tconv_b = 0.1 * jax.random.normal(ks[1], (out_channels,), jnp.float32)

    dc_in = in_channels * 2 if in_channels == out_channels else in_channels
    conv1_w = 0.1 * jax.random.normal(ks[2], (3, 3, dc_in, out_channels), jnp.float32)
    conv2_w = 0.1 * jax.random.normal(ks[3], (3, 3, out_channels, out_channels),
                                      jnp.float32)

    def bn(k_gamma, k_beta, k_mean, k_var, c):
        gamma = 1.0 + 0.1 * jax.random.normal(k_gamma, (c,), jnp.float32)
        beta = 0.1 * jax.random.normal(k_beta, (c,), jnp.float32)
        rmean = 0.1 * jax.random.normal(k_mean, (c,), jnp.float32)
        rvar = jax.random.uniform(k_var, (c,), jnp.float32, 0.5, 1.5)
        scale = gamma / jnp.sqrt(rvar + eps)
        shift = beta - rmean * scale
        return scale, shift

    bn1_scale, bn1_shift = bn(ks[4], ks[5], ks[6], ks[7], out_channels)
    bn2_scale, bn2_shift = bn(ks[8], ks[9], ks[10], ks[11], out_channels)

    return dict(tconv_w=tconv_w, tconv_b=tconv_b,
                conv1_w=conv1_w, conv2_w=conv2_w,
                bn1_scale=bn1_scale, bn1_shift=bn1_shift,
                bn2_scale=bn2_scale, bn2_shift=bn2_shift)


if __name__ == "__main__":
    # Standard U-Net decoder setting: in_channels = 2 * out_channels; the skip
    # connection carries out_channels channels at 2x spatial resolution.
    in_channels, out_channels = 8, 4
    B, H, W = 2, 16, 16

    key = jax.random.PRNGKey(0)
    kx, kskip, kp = jax.random.split(key, 3)
    x = jax.random.normal(kx, (B, in_channels, H, W), jnp.float32)                  # NCHW
    skip = jax.random.normal(kskip, (B, out_channels, 2 * H, 2 * W), jnp.float32)   # NCHW
    params = make_params(kp, in_channels, out_channels)

    ref = jax.block_until_ready(reference_forward(x, skip, params))

    # Default tiling (whole image per grid step) plus a forced multi-tile run
    # that exercises the halo / image-border paths of the conv kernel.
    for tconv_cap, conv_cap in ((None, None), (4, 8)):
        out = jax.block_until_ready(
            transpose_conv_block_forward(x, skip, params,
                                         tconv_row_cap=tconv_cap,
                                         conv_row_cap=conv_cap))
        assert out.shape == (B, out_channels, 2 * H, 2 * W), out.shape
        assert out.dtype == jnp.float32
        max_err = float(jnp.max(jnp.abs(out - ref)))
        # bf16 inputs / weights / intermediates vs. pure-f32 reference.
        assert jnp.allclose(out, ref, atol=5e-2, rtol=5e-2), (tconv_cap, conv_cap, max_err)

    print("KERNEL_OK")
</pallas_src>

<mosaic_0001>
module attributes {stable_mosaic.version = 11 : i64} {
  func.func @_tconv_kernel(%arg0: i32, %arg1: i32, %arg2: memref<1x16x16x8xbf16, #tpu.memory_space<vmem>>, %arg3: memref<8x16xbf16, #tpu.memory_space<vmem>>, %arg4: memref<1x16xf32, #tpu.memory_space<vmem>>, %arg5: memref<1x16x2x16x8xbf16, #tpu.memory_space<vmem>>) attributes {dimension_semantics = [#tpu.dimension_semantics<parallel>, #tpu.dimension_semantics<parallel>], iteration_bounds = array<i64: 2, 1>, scalar_prefetch = 0 : i64, scratch_operands = 0 : i64, tpu.core_type = #tpu.core_type<tc>, window_params = [{transform_indices = @transform_0, window_bounds = array<i64: 1, 16, 16, 8>}, {pipeline_mode = #tpu.pipeline_mode<synchronous>, transform_indices = @transform_1, window_bounds = array<i64: 8, 16>}, {pipeline_mode = #tpu.pipeline_mode<synchronous>, transform_indices = @transform_2, window_bounds = array<i64: 1, 16>}, {transform_indices = @transform_3, window_bounds = array<i64: 1, 16, 2, 16, 8>}]} {
    %c0 = arith.constant 0 : index
    %c0_0 = arith.constant 0 : index
    %c0_1 = arith.constant 0 : index
    %c0_2 = arith.constant 0 : index
    %0 = vector.load %arg2[%c0, %c0_0, %c0_1, %c0_2] : memref<1x16x16x8xbf16, #tpu.memory_space<vmem>>, vector<1x16x16x8xbf16>
    %1 = vector.shape_cast %0 : vector<1x16x16x8xbf16> to vector<16x16x8xbf16>
    %2 = vector.shape_cast %1 : vector<16x16x8xbf16> to vector<256x8xbf16>
    %c0_3 = arith.constant 0 : index
    %c0_4 = arith.constant 0 : index
    %3 = vector.load %arg3[%c0_3, %c0_4] : memref<8x16xbf16, #tpu.memory_space<vmem>>, vector<8x16xbf16>
    %cst = arith.constant dense<0.000000e+00> : vector<256x16xf32>
    %4 = tpu.matmul %2, %3, %cst {dimension_numbers = #tpu.dot_dimension_numbers<[1], [0], [0], [1], [0, 0, 1, 1], [], []>} : vector<256x8xbf16>, vector<8x16xbf16>, vector<256x16xf32> -> vector<256x16xf32>
    %c0_5 = arith.constant 0 : index
    %c0_6 = arith.constant 0 : index
    %5 = vector.load %arg4[%c0_5, %c0_6] : memref<1x16xf32, #tpu.memory_space<vmem>>, vector<1x16xf32>
    %6 = vector.broadcast %5 : vector<1x16xf32> to vector<256x16xf32>
    %7 = arith.addf %4, %6 : vector<256x16xf32>
    %8 = arith.truncf %7 : vector<256x16xf32> to vector<256x16xbf16>
    %9 = vector.extract_strided_slice %8 {offsets = [0, 0], sizes = [256, 8], strides = [1, 1]} : vector<256x16xbf16> to vector<256x8xbf16>
    %10 = vector.shape_cast %9 : vector<256x8xbf16> to vector<16x16x8xbf16>
    %c0_7 = arith.constant 0 : index
    %c0_8 = arith.constant 0 : index
    %c0_9 = arith.constant 0 : index
    %c0_10 = arith.constant 0 : index
    %c0_11 = arith.constant 0 : index
    %11 = vector.load %arg5[%c0_7, %c0_8, %c0_9, %c0_10, %c0_11] : memref<1x16x2x16x8xbf16, #tpu.memory_space<vmem>>, vector<1x16x1x16x8xbf16>
    %12 = vector.shape_cast %11 : vector<1x16x1x16x8xbf16> to vector<16x16x8xbf16>
    %13 = vector.shape_cast %10 : vector<16x16x8xbf16> to vector<1x16x1x16x8xbf16>
    tpu.vector_store %arg5[%c0_7, %c0_8, %c0_9, %c0_10, %c0_11], %13 {strides = array<i32>} : memref<1x16x2x16x8xbf16, #tpu.memory_space<vmem>>, vector<1x16x1x16x8xbf16>,
    %14 = vector.extract_strided_slice %8 {offsets = [0, 8], sizes = [256, 8], strides = [1, 1]} : vector<256x16xbf16> to vector<256x8xbf16>
    %15 = vector.shape_cast %14 : vector<256x8xbf16> to vector<16x16x8xbf16>
    %c0_12 = arith.constant 0 : index
    %c0_13 = arith.constant 0 : index
    %c1 = arith.constant 1 : index
    %c0_14 = arith.constant 0 : index
    %c0_15 = arith.constant 0 : index
    %16 = vector.load %arg5[%c0_12, %c0_13, %c1, %c0_14, %c0_15] : memref<1x16x2x16x8xbf16, #tpu.memory_space<vmem>>, vector<1x16x1x16x8xbf16>
    %17 = vector.shape_cast %16 : vector<1x16x1x16x8xbf16> to vector<16x16x8xbf16>
    %18 = vector.shape_cast %15 : vector<16x16x8xbf16> to vector<1x16x1x16x8xbf16>
    tpu.vector_store %arg5[%c0_12, %c0_13, %c1, %c0_14, %c0_15], %18 {strides = array<i32>} : memref<1x16x2x16x8xbf16, #tpu.memory_space<vmem>>, vector<1x16x1x16x8xbf16>,
    return
  }
  func.func @transform_0(%arg0: i32, %arg1: i32) -> (i32, i32, i32, i32) {
    %c0_i32 = arith.constant 0 : i32
    %c0_i32_0 = arith.constant 0 : i32
    %c0_i32_1 = arith.constant 0 : i32
    return %arg0, %arg1, %c0_i32, %c0_i32_0 : i32, i32, i32, i32
  }
  func.func @transform_1(%arg0: i32, %arg1: i32) -> (i32, i32) {
    %c0_i32 = arith.constant 0 : i32
    %c0_i32_0 = arith.constant 0 : i32
    %c0_i32_1 = arith.constant 0 : i32
    return %c0_i32, %c0_i32_0 : i32, i32
  }
  func.func @transform_2(%arg0: i32, %arg1: i32) -> (i32, i32) {
    %c0_i32 = arith.constant 0 : i32
    %c0_i32_0 = arith.constant 0 : i32
    %c0_i32_1 = arith.constant 0 : i32
    return %c0_i32, %c0_i32_0 : i32, i32
  }
  func.func @transform_3(%arg0: i32, %arg1: i32) -> (i32, i32, i32, i32, i32) {
    %c0_i32 = arith.constant 0 : i32
    %c0_i32_0 = arith.constant 0 : i32
    %c0_i32_1 = arith.constant 0 : i32
    %c0_i32_2 = arith.constant 0 : i32
    return %arg0, %arg1, %c0_i32, %c0_i32_0, %c0_i32_1 : i32, i32, i32, i32, i32
  }
}

</mosaic_0001>

<llo_original>
// kernel: tpu_custom_call.1
$region0: #{tpu_custom_call.1}
  #allocation0 [shape = 'u32[]', space=smem, size = 0x4, offset = 0x4, fixed_abs, tag = 'smem constant byte address 0x4 - core index']
  #allocation1 [shape = 'u32[144,128]{1,0:T(1,128)}', space=vmem, size = 0x12000, scoped, tag = 'internal scratch']
  %s0 = inlined_call_operand.vmem [shape: bf16[2,16,16,8], index: 0, kind: input, shape index: {}]
  %s1 = inlined_call_operand.vmem [shape: bf16[8,16], index: 1, kind: input, shape index: {}]
  %s2 = inlined_call_operand.vmem [shape: f32[1,16], index: 2, kind: input, shape index: {}]
  %s3 = inlined_call_operand.vmem [shape: bf16[2,16,2,16,8], index: 3, kind: output, shape index: {}]
  %s4 = sld [smem:[#allocation0]]
  $region45: #{tpu_custom_call.1} parent=0
    _
  %s6 = ssub.s32 1, %s4
  %s7 = scalar_select 0, %s6, %s4
  loop: start=0, step=1, limit=4
  $region2: #{tpu_custom_call.1} parent=0 // loop_pre_header
    _
  $region3: #{tpu_custom_call.1} parent=0 // loop_header
    %s9 = sphi 0, %s13
    %p10 = scmp.ge.s32.totalorder %s9, 4
    %s16 = sphi 0, %s28
    %s17 = sphi 0, %s24
    %s18 = sphi 0, %s16
    %s19 = sphi 0, %s17
    %s20 = sphi 0, %s18
    %s21 = sphi 0, %s19
    %s33 = sphi 0, %s35
    %s36 = sphi 0, %s33
    %s37 = sphi 0, %s36
    %s53 = sphi 0, %s37
    %s57 = sphi 0, %s57
    %s59 = sphi 0, %s57
    %s60 = sphi 0, %s59
    %s74 = sphi 0, %s60
    %s78 = sphi 0, %s78
    %s80 = sphi 0, %s78
    %s81 = sphi 0, %s80
    %s95 = sphi 0, %s81
    %s103 = sphi 0, %s105
    %s106 = sphi 0, %s103
    %s107 = sphi 0, %s106
    %s123 = sphi 0, %s107
  $region4: #{tpu_custom_call.1} parent=0 // loop_header_branch
    %12 = sbr.rel (%p10) target = $region8
  $region5: #{tpu_custom_call.1} parent=0 // loop_body
    %s14 = ssub.s32 %s9, 1
    %s15 = ssub.s32 %s9, 2
    %s22 = sadd.s32 1, %s17
    %p23 = scmp.ge.s32.totalorder %s22, 1
    %s24 = scalar_select %p23, 0, %s22
    %s25 = sadd.s32 1, %s16
    %s26 = scalar_select %p23, %s25, %s16
    %p27 = scmp.ge.s32.totalorder %s26, 2
    %s28 = scalar_select %p27, 0, %s26
    %s29 = ssub.s32 %s16, %s28
    %s30 = ssub.s32 %s17, %s24
    %s31 = sor.u32 %s29, %s30
    %p32 = scmp.eq.s32.totalorder %s31, 0
    %s34 = sadd.s32 %s33, 1
    %s35 = scalar_select %p32, %s33, %s34
    %p38 = pneg %p32
    %p39 = scmp.eq.s32.totalorder %s9, 1
    %p40 = por %p38, %p39
    %p41 = scmp.ne.s32.totalorder %s33, %s36
    %p42 = scmp.eq.s32.totalorder %s9, 0
    %p43 = por %p41, %p42
    %p44 = scmp.ne.s32.totalorder %s33, %s36
    %p45 = scmp.eq.s32.totalorder %s14, 1
    %p46 = por %p44, %p45
    %p47 = scmp.ne.s32.totalorder %s36, %s37
    %p48 = scmp.eq.s32.totalorder %s14, 0
    %p49 = por %p47, %p48
    %p50 = scmp.ne.s32.totalorder %s36, %s37
    %p51 = scmp.eq.s32.totalorder %s15, 1
    %p52 = por %p50, %p51
    %p54 = scmp.ne.s32.totalorder %s37, %s53
    %p55 = scmp.eq.s32.totalorder %s15, 0
    %p56 = por %p54, %p55
    %s58 = sadd.s32 %s57, 1
    %p61 = scmp.eq.s32.totalorder %s9, 1
    %p62 = scmp.ne.s32.totalorder %s57, %s59
    %p63 = scmp.eq.s32.totalorder %s9, 0
    %p64 = por %p62, %p63
    %p65 = scmp.ne.s32.totalorder %s57, %s59
    %p66 = scmp.eq.s32.totalorder %s14, 1
    %p67 = por %p65, %p66
    %p68 = scmp.ne.s32.totalorder %s59, %s60
    %p69 = scmp.eq.s32.totalorder %s14, 0
    %p70 = por %p68, %p69
    %p71 = scmp.ne.s32.totalorder %s59, %s60
    %p72 = scmp.eq.s32.totalorder %s15, 1
    %p73 = por %p71, %p72
    %p75 = scmp.ne.s32.totalorder %s60, %s74
    %p76 = scmp.eq.s32.totalorder %s15, 0
    %p77 = por %p75, %p76
    %s79 = sadd.s32 %s78, 1
    %p82 = scmp.eq.s32.totalorder %s9, 1
    %p83 = scmp.ne.s32.totalorder %s78, %s80
    %p84 = scmp.eq.s32.totalorder %s9, 0
    %p85 = por %p83, %p84
    %p86 = scmp.ne.s32.totalorder %s78, %s80
    %p87 = scmp.eq.s32.totalorder %s14, 1
    %p88 = por %p86, %p87
    %p89 = scmp.ne.s32.totalorder %s80, %s81
    %p90 = scmp.eq.s32.totalorder %s14, 0
    %p91 = por %p89, %p90
    %p92 = scmp.ne.s32.totalorder %s80, %s81
    %p93 = scmp.eq.s32.totalorder %s15, 1
    %p94 = por %p92, %p93
    %p96 = scmp.ne.s32.totalorder %s81, %s95
    %p97 = scmp.eq.s32.totalorder %s15, 0
    %p98 = por %p96, %p97
    %s99 = ssub.s32 %s16, %s28
    %s100 = ssub.s32 %s17, %s24
    %s101 = sor.u32 %s99, %s100
    %p102 = scmp.eq.s32.totalorder %s101, 0
    %s104 = sadd.s32 %s103, 1
    %s105 = scalar_select %p102, %s103, %s104
    %p108 = pneg %p102
    %p109 = scmp.eq.s32.totalorder %s9, 1
    %p110 = por %p108, %p109
    %p111 = scmp.ne.s32.totalorder %s103, %s106
    %p112 = scmp.eq.s32.totalorder %s9, 0
    %p113 = por %p111, %p112
    %p114 = scmp.ne.s32.totalorder %s103, %s106
    %p115 = scmp.eq.s32.totalorder %s14, 1
    %p116 = por %p114, %p115
    %p117 = scmp.ne.s32.totalorder %s106, %s107
    %p118 = scmp.eq.s32.totalorder %s14, 0
    %p119 = por %p117, %p118
    %p120 = scmp.ne.s32.totalorder %s106, %s107
    %p121 = scmp.eq.s32.totalorder %s15, 1
    %p122 = por %p120, %p121
    %p124 = scmp.ne.s32.totalorder %s107, %s123
    %p125 = scmp.eq.s32.totalorder %s15, 0
    %p126 = por %p124, %p125
    %p127 = scmp.le.s32.totalorder 1, %s9
    %p128 = scmp.lt.s32.totalorder %s9, 3
    %p129 = pnand %p127, %p128
    %p130 = pneg %p129
    // Predicated region
    $region9: #{tpu_custom_call.1} parent=5 // pred_check
      _
    $region10: #{tpu_custom_call.1} parent=5 // pred_check_branch
      %132 = sbr.rel (%p129) target = $region12
    $region11: #{tpu_custom_call.1} parent=5 // pred_region
      %s133 = ssub.s32 %s9, 1
      // Predicated region
      $region13: #{tpu_custom_call.1} parent=11 // pred_check
        %p134 = pneg %p70
      $region14: #{tpu_custom_call.1} parent=11 // pred_check_branch
        %136 = sbr.rel (%p134) target = $region16
      $region15: #{tpu_custom_call.1} parent=11 // pred_region
        _
      $region16: #{tpu_custom_call.1} parent=11 // pred_fallthru
        _
      // Predicated region
      $region17: #{tpu_custom_call.1} parent=11 // pred_check
        %p137 = pneg %p91
      $region18: #{tpu_custom_call.1} parent=11 // pred_check_branch
        %139 = sbr.rel (%p137) target = $region20
      $region19: #{tpu_custom_call.1} parent=11 // pred_region
        _
      $region20: #{tpu_custom_call.1} parent=11 // pred_fallthru
        _
    $region12: #{tpu_custom_call.1} parent=5 // pred_fallthru
      _
    %p140 = scmp.lt.s32.totalorder %s9, 2
    // Predicated region
    $region21: #{tpu_custom_call.1} parent=5 // pred_check
      %p141 = pneg %p140
    $region22: #{tpu_custom_call.1} parent=5 // pred_check_branch
      %143 = sbr.rel (%p141) target = $region24
    $region23: #{tpu_custom_call.1} parent=5 // pred_region
      // Predicated region
      $region25: #{tpu_custom_call.1} parent=23 // pred_check
        %p144 = pneg %p43
      $region26: #{tpu_custom_call.1} parent=23 // pred_check_branch
        %146 = sbr.rel (%p144) target = $region28
      $region27: #{tpu_custom_call.1} parent=23 // pred_region
        %s147 = smul.u32 16, %s17
        %p148 = scmp.lt.s32.totalorder %s16, 1
        %s149 = scalar_select %p148, %s16, 1
        %p150 = scmp.lt.s32.totalorder %s147, 15
        %s151 = scalar_select %p150, %s147, 15
        %s152 = smul.addr %s151, 2
        %s153 = smul.addr %s149, 32
        %s154 = sadd.s32 %s152, %s153
        %s155 = smul.addr %s154, 4
        %s156 = scalar_lea.vmem %s0, %s155
        %s157 = smul.u32 16, %s17
      $region28: #{tpu_custom_call.1} parent=23 // pred_fallthru
        _
    $region24: #{tpu_custom_call.1} parent=5 // pred_fallthru
      _
    %p158 = scmp.le.s32.totalorder 1, %s9
    %p159 = scmp.lt.s32.totalorder %s9, 3
    %p160 = pnand %p158, %p159
    %p161 = pneg %p160
    // Predicated region
    $region29: #{tpu_custom_call.1} parent=5 // pred_check
      _
    $region30: #{tpu_custom_call.1} parent=5 // pred_check_branch
      %163 = sbr.rel (%p160) target = $region32
    $region31: #{tpu_custom_call.1} parent=5 // pred_region
      %s164 = ssub.s32 %s9, 1
      %s165 = smul.u32 16, %s19
      %p166 = scmp.lt.s32.totalorder %s18, 1
      %s167 = scalar_select %p166, %s18, 1
      %p168 = scmp.lt.s32.totalorder %s165, 15
      %s169 = scalar_select %p168, %s165, 15
      %s170 = smul.addr %s169, 2
      %s171 = smul.addr %s167, 32
      %s172 = sadd.s32 %s170, %s171
      %s173 = smul.addr %s172, 4
      %s174 = scalar_lea.vmem %s0, %s173
      %p175 = pneg %p49
      %p176 = pneg %p46
      %p177 = pneg %p70
      %p178 = pneg %p67
      %p179 = pneg %p91
      %p180 = pneg %p88
      %p181 = pneg %p119
      %p182 = pneg %p116
      %s183 = smul.u32 16, %s19
      %p184 = scmp.lt.s32.totalorder %s18, 1
      %s185 = scalar_select %p184, %s18, 1
      %p186 = scmp.lt.s32.totalorder %s183, 15
      %s187 = scalar_select %p186, %s183, 15
      %s188 = smul.addr %s187, 4
      %s189 = smul.addr %s185, 64
      %s190 = sadd.s32 %s188, %s189
      %s191 = smul.addr %s190, 4
      %s192 = scalar_lea.vmem %s3, %s191
      %s193 = smul.u32 16, %s19
      %p194 = scmp.lt.s32.totalorder %s18, 1
      %s195 = scalar_select %p194, %s18, 1
      %p196 = scmp.lt.s32.totalorder %s193, 15
      %s197 = scalar_select %p196, %s193, 15
      %s198 = smul.addr %s197, 2
      %s199 = smul.addr %s195, 32
      %s200 = sadd.s32 %s198, %s199
      %s201 = smul.addr %s200, 4
      %s202 = scalar_lea.vmem %s0, %s201
      %s203 = smul.u32 16, %s19
      %s204 = smul.u32 16, %s19
      %p205 = scmp.lt.s32.totalorder %s18, 1
      %s206 = scalar_select %p205, %s18, 1
      %p207 = scmp.lt.s32.totalorder %s204, 15
      %s208 = scalar_select %p207, %s204, 15
      %s209 = smul.addr %s208, 4
      %s210 = smul.addr %s206, 64
      %s211 = sadd.s32 %s209, %s210
      %s212 = smul.addr %s211, 4
      %s213 = scalar_lea.vmem %s3, %s212
      %s214 = smul.u32 16, %s19
      %v216 = vld [vmem:[%s202] sm:$0xf]
      %v217 = vld [vmem:[%s202 + $0x4] sm:$0xf]
      %v218 = vld [vmem:[%s202 + $0x8] sm:$0xf]
      %v219 = vld [vmem:[%s202 + $0xc] sm:$0xf]
      %v220 = vld [vmem:[%s202 + $0x10] sm:$0xf]
      %v221 = vld [vmem:[%s202 + $0x14] sm:$0xf]
      %v222 = vld [vmem:[%s202 + $0x18] sm:$0xf]
      %v223 = vld [vmem:[%s202 + $0x1c] sm:$0xf]
      %v224 = vld [vmem:[%s202 + $0x20] sm:$0xf]
      %v225 = vld [vmem:[%s202 + $0x24] sm:$0xf]
      %v226 = vld [vmem:[%s202 + $0x28] sm:$0xf]
      %v227 = vld [vmem:[%s202 + $0x2c] sm:$0xf]
      %v228 = vld [vmem:[%s202 + $0x30] sm:$0xf]
      %v229 = vld [vmem:[%s202 + $0x34] sm:$0xf]
      %v230 = vld [vmem:[%s202 + $0x38] sm:$0xf]
      %v231 = vld [vmem:[%s202 + $0x3c] sm:$0xf]
      %v232 = vld [vmem:[%s202 + $0x40] sm:$0xf]
      %v233 = vld [vmem:[%s202 + $0x44] sm:$0xf]
      %v234 = vld [vmem:[%s202 + $0x48] sm:$0xf]
      %v235 = vld [vmem:[%s202 + $0x4c] sm:$0xf]
      %v236 = vld [vmem:[%s202 + $0x50] sm:$0xf]
      %v237 = vld [vmem:[%s202 + $0x54] sm:$0xf]
      %v238 = vld [vmem:[%s202 + $0x58] sm:$0xf]
      %v239 = vld [vmem:[%s202 + $0x5c] sm:$0xf]
      %v240 = vld [vmem:[%s202 + $0x60] sm:$0xf]
      %v241 = vld [vmem:[%s202 + $0x64] sm:$0xf]
      %v242 = vld [vmem:[%s202 + $0x68] sm:$0xf]
      %v243 = vld [vmem:[%s202 + $0x6c] sm:$0xf]
      %v244 = vld [vmem:[%s202 + $0x70] sm:$0xf]
      %v245 = vld [vmem:[%s202 + $0x74] sm:$0xf]
      %v246 = vld [vmem:[%s202 + $0x78] sm:$0xf]
      %v247 = vld [vmem:[%s202 + $0x7c] sm:$0xf]
      %v248 = vld [vmem:[%s1] sm:$0xf]
      %v249 = vld [vmem:[%s2] sm:$0x1]
      %v251 = vlaneseq
      %v252 = vshrl.u32 %v251, 7
      %v253 = vsub.s32 0, %v252
      %v254 = vrot.slane %v249, %v253
      %v288 = vunpack.c.l.b16 %v216
      %v289 = vunpack.c.l.b16 %v217
      %v290 = vunpack.c.l.b16 %v218
      %v291 = vunpack.c.l.b16 %v219
      %v292 = vunpack.c.l.b16 %v220
      %v293 = vunpack.c.l.b16 %v221
      %v294 = vunpack.c.l.b16 %v222
      %v295 = vunpack.c.l.b16 %v223
      %v296 = vunpack.c.l.b16 %v224
      %v297 = vunpack.c.l.b16 %v225
      %v298 = vunpack.c.l.b16 %v226
      %v299 = vunpack.c.l.b16 %v227
      %v300 = vunpack.c.l.b16 %v228
      %v301 = vunpack.c.l.b16 %v229
      %v302 = vunpack.c.l.b16 %v230
      %v303 = vunpack.c.l.b16 %v231
      %v304 = vunpack.c.l.b16 %v232
      %v305 = vunpack.c.l.b16 %v233
      %v306 = vunpack.c.l.b16 %v234
      %v307 = vunpack.c.l.b16 %v235
      %v308 = vunpack.c.l.b16 %v236
      %v309 = vunpack.c.l.b16 %v237
      %v310 = vunpack.c.l.b16 %v238
      %v311 = vunpack.c.l.b16 %v239
      %v312 = vunpack.c.l.b16 %v240
      %v313 = vunpack.c.l.b16 %v241
      %v314 = vunpack.c.l.b16 %v242
      %v315 = vunpack.c.l.b16 %v243
      %v316 = vunpack.c.l.b16 %v244
      %v317 = vunpack.c.l.b16 %v245
      %v318 = vunpack.c.l.b16 %v246
      %v319 = vunpack.c.l.b16 %v247
      %v320 = vpack.c.b16 %v289, %v288
      %v321 = vpack.c.b16 %v291, %v290
      %v322 = vpack.c.b16 %v293, %v292
      %v323 = vpack.c.b16 %v295, %v294
      %v324 = vpack.c.b16 %v297, %v296
      %v325 = vpack.c.b16 %v299, %v298
      %v326 = vpack.c.b16 %v301, %v300
      %v327 = vpack.c.b16 %v303, %v302
      %v328 = vpack.c.b16 %v305, %v304
      %v329 = vpack.c.b16 %v307, %v306
      %v330 = vpack.c.b16 %v309, %v308
      %v331 = vpack.c.b16 %v311, %v310
      %v332 = vpack.c.b16 %v313, %v312
      %v333 = vpack.c.b16 %v315, %v314
      %v334 = vpack.c.b16 %v317, %v316
      %v335 = vpack.c.b16 %v319, %v318
      %vm336 = vcmask 64512
      %v338 = vsel %vm336, %v320, 0
      %v341 = vsel %vm336, %v321, 0
      %v344 = vsel %vm336, %v322, 0
      %v347 = vsel %vm336, %v323, 0
      %v350 = vsel %vm336, %v324, 0
      %v353 = vsel %vm336, %v325, 0
      %v356 = vsel %vm336, %v326, 0
      %v359 = vsel %vm336, %v327, 0
      %v362 = vsel %vm336, %v328, 0
      %v365 = vsel %vm336, %v329, 0
      %v368 = vsel %vm336, %v330, 0
      %v371 = vsel %vm336, %v331, 0
      %v374 = vsel %vm336, %v332, 0
      %v377 = vsel %vm336, %v333, 0
      %v380 = vsel %vm336, %v334, 0
      %v383 = vsel %vm336, %v335, 0
      %vm385 = vcmask 1043456
      %v387 = vsel %vm385, %v248, 0
      %389 = vmatprep.subr.bf16.mxu0 0
      %390 = vmatpush1.bf16.msra.mxu0 %v387
      %391 = vmatprep.subr.bf16.mxu0 0
      %392 = vmatpush1.bf16.msra.mxu0 0
      %393 = vmatprep.subr.bf16.mxu0 0
      %394 = vmatpush1.bf16.msra.mxu0 0
      %395 = vmatprep.subr.bf16.mxu0 0
      %396 = vmatpush1.bf16.msra.mxu0 0
      %397 = vmatprep.subr.bf16.mxu0 0
      %398 = vmatpush1.bf16.msra.mxu0 0
      %399 = vmatprep.subr.bf16.mxu0 0
      %400 = vmatpush1.bf16.msra.mxu0 0
      %401 = vmatprep.subr.bf16.mxu0 0
      %402 = vmatpush1.bf16.msra.mxu0 0
      %403 = vmatprep.subr.bf16.mxu0 0
      %404 = vmatpush1.bf16.msra.mxu0 0
      %405 = vmatprep.subr.bf16.mxu0 0
      %406 = vmatpush1.bf16.msra.mxu0 0
      %407 = vmatprep.subr.bf16.mxu0 0
      %408 = vmatpush1.bf16.msra.mxu0 0
      %409 = vmatprep.subr.bf16.mxu0 0
      %410 = vmatpush1.bf16.msra.mxu0 0
      %411 = vmatprep.subr.bf16.mxu0 0
      %412 = vmatpush1.bf16.msra.mxu0 0
      %413 = vmatprep.subr.bf16.mxu0 0
      %414 = vmatpush1.bf16.msra.mxu0 0
      %415 = vmatprep.subr.bf16.mxu0 0
      %416 = vmatpush1.bf16.msra.mxu0 0
      %417 = vmatprep.subr.bf16.mxu0 0
      %418 = vmatpush1.bf16.msra.mxu0 0
      %419 = vmatprep.subr.bf16.mxu0 0
      %420 = vmatpush1.bf16.msra.mxu0 0
      %421 = vmatprep.mubr.bf16.mxu0 0
      %422 = vmatmul.mubr.bf16.gmra.mrb[0].mxu0 %v338
      %v423 = vpop.f32.mrb[0].mxu0
      %v424 = vadd.f32 %v254, %v423
      %v425 = vpop.f32.mrb[0].mxu0
      %v426 = vpop.f32.mrb[0].mxu0
      %v427 = vadd.f32 %v254, %v426
      %v428 = vpop.f32.mrb[0].mxu0
      %429 = vmatprep.mubr.bf16.mxu0 0
      %430 = vmatmul.mubr.bf16.gmra.mrb[0].mxu0 %v341
      %v431 = vpop.f32.mrb[0].mxu0
      %v432 = vadd.f32 %v254, %v431
      %v433 = vpop.f32.mrb[0].mxu0
      %v434 = vpop.f32.mrb[0].mxu0
      %v435 = vadd.f32 %v254, %v434
      %v436 = vpop.f32.mrb[0].mxu0
      %437 = vmatprep.mubr.bf16.mxu0 0
      %438 = vmatmul.mubr.bf16.gmra.mrb[0].mxu0 %v344
      %v439 = vpop.f32.mrb[0].mxu0
      %v440 = vadd.f32 %v254, %v439
      %v441 = vpop.f32.mrb[0].mxu0
      %v442 = vpop.f32.mrb[0].mxu0
      %v443 = vadd.f32 %v254, %v442
      %v444 = vpop.f32.mrb[0].mxu0
      %445 = vmatprep.mubr.bf16.mxu0 0
      %446 = vmatmul.mubr.bf16.gmra.mrb[0].mxu0 %v347
      %v447 = vpop.f32.mrb[0].mxu0
      %v448 = vadd.f32 %v254, %v447
      %v449 = vpop.f32.mrb[0].mxu0
      %v450 = vpop.f32.mrb[0].mxu0
      %v451 = vadd.f32 %v254, %v450
      %v452 = vpop.f32.mrb[0].mxu0
      %453 = vmatprep.mubr.bf16.mxu0 0
      %454 = vmatmul.mubr.bf16.gmra.mrb[0].mxu0 %v350
      %v455 = vpop.f32.mrb[0].mxu0
      %v456 = vadd.f32 %v254, %v455
      %v457 = vpop.f32.mrb[0].mxu0
      %v458 = vpop.f32.mrb[0].mxu0
      %v459 = vadd.f32 %v254, %v458
      %v460 = vpop.f32.mrb[0].mxu0
      %461 = vmatprep.mubr.bf16.mxu0 0
      %462 = vmatmul.mubr.bf16.gmra.mrb[0].mxu0 %v353
      %v463 = vpop.f32.mrb[0].mxu0
      %v464 = vadd.f32 %v254, %v463
      %v465 = vpop.f32.mrb[0].mxu0
      %v466 = vpop.f32.mrb[0].mxu0
      %v467 = vadd.f32 %v254, %v466
      %v468 = vpop.f32.mrb[0].mxu0
      %469 = vmatprep.mubr.bf16.mxu0 0
      %470 = vmatmul.mubr.bf16.gmra.mrb[0].mxu0 %v356
      %v471 = vpop.f32.mrb[0].mxu0
      %v472 = vadd.f32 %v254, %v471
      %v473 = vpop.f32.mrb[0].mxu0
      %v474 = vpop.f32.mrb[0].mxu0
      %v475 = vadd.f32 %v254, %v474
      %v476 = vpop.f32.mrb[0].mxu0
      %477 = vmatprep.mubr.bf16.mxu0 0
      %478 = vmatmul.mubr.bf16.gmra.mrb[0].mxu0 %v359
      %v479 = vpop.f32.mrb[0].mxu0
      %v480 = vadd.f32 %v254, %v479
      %v481 = vpop.f32.mrb[0].mxu0
      %v482 = vpop.f32.mrb[0].mxu0
      %v483 = vadd.f32 %v254, %v482
      %v484 = vpop.f32.mrb[0].mxu0
      %485 = vmatprep.mubr.bf16.mxu0 0
      %486 = vmatmul.mubr.bf16.gmra.mrb[0].mxu0 %v362
      %v487 = vpop.f32.mrb[0].mxu0
      %v488 = vadd.f32 %v254, %v487
      %v489 = vpop.f32.mrb[0].mxu0
      %v490 = vpop.f32.mrb[0].mxu0
      %v491 = vadd.f32 %v254, %v490
      %v492 = vpop.f32.mrb[0].mxu0
      %493 = vmatprep.mubr.bf16.mxu0 0
      %494 = vmatmul.mubr.bf16.gmra.mrb[0].mxu0 %v365
      %v495 = vpop.f32.mrb[0].mxu0
      %v496 = vadd.f32 %v254, %v495
      %v497 = vpop.f32.mrb[0].mxu0
      %v498 = vpop.f32.mrb[0].mxu0
      %v499 = vadd.f32 %v254, %v498
      %v500 = vpop.f32.mrb[0].mxu0
      %501 = vmatprep.mubr.bf16.mxu0 0
      %502 = vmatmul.mubr.bf16.gmra.mrb[0].mxu0 %v368
      %v503 = vpop.f32.mrb[0].mxu0
      %v504 = vadd.f32 %v254, %v503
      %v505 = vpop.f32.mrb[0].mxu0
      %v506 = vpop.f32.mrb[0].mxu0
      %v507 = vadd.f32 %v254, %v506
      %v508 = vpop.f32.mrb[0].mxu0
      %509 = vmatprep.mubr.bf16.mxu0 0
      %510 = vmatmul.mubr.bf16.gmra.mrb[0].mxu0 %v371
      %v511 = vpop.f32.mrb[0].mxu0
      %v512 = vadd.f32 %v254, %v511
      %v513 = vpop.f32.mrb[0].mxu0
      %v514 = vpop.f32.mrb[0].mxu0
      %v515 = vadd.f32 %v254, %v514
      %v516 = vpop.f32.mrb[0].mxu0
      %517 = vmatprep.mubr.bf16.mxu0 0
      %518 = vmatmul.mubr.bf16.gmra.mrb[0].mxu0 %v374
      %v519 = vpop.f32.mrb[0].mxu0
      %v520 = vadd.f32 %v254, %v519
      %v521 = vpop.f32.mrb[0].mxu0
      %v522 = vpop.f32.mrb[0].mxu0
      %v523 = vadd.f32 %v254, %v522
      %v524 = vpop.f32.mrb[0].mxu0
      %525 = vmatprep.mubr.bf16.mxu0 0
      %526 = vmatmul.mubr.bf16.gmra.mrb[0].mxu0 %v377
      %v527 = vpop.f32.mrb[0].mxu0
      %v528 = vadd.f32 %v254, %v527
      %v529 = vpop.f32.mrb[0].mxu0
      %v530 = vpop.f32.mrb[0].mxu0
      %v531 = vadd.f32 %v254, %v530
      %v532 = vpop.f32.mrb[0].mxu0
      %533 = vmatprep.mubr.bf16.mxu0 0
      %534 = vmatmul.mubr.bf16.gmra.mrb[0].mxu0 %v380
      %v535 = vpop.f32.mrb[0].mxu0
      %v536 = vadd.f32 %v254, %v535
      %v537 = vpop.f32.mrb[0].mxu0
      %v538 = vpop.f32.mrb[0].mxu0
      %v539 = vadd.f32 %v254, %v538
      %v540 = vpop.f32.mrb[0].mxu0
      %541 = vmatprep.mubr.bf16.mxu0 0
      %542 = vmatmul.mubr.bf16.gmra.mrb[0].mxu0 %v383
      %v543 = vpop.f32.mrb[0].mxu0
      %v544 = vadd.f32 %v254, %v543
      %v545 = vpop.f32.mrb[0].mxu0
      %v546 = vpop.f32.mrb[0].mxu0
      %v547 = vadd.f32 %v254, %v546
      %v548 = vpop.f32.mrb[0].mxu0
      %549 = vdwg.mxu0
      %v550 = vpack.c.bf16 %v427, %v424
      %v551 = vpack.c.bf16 %v435, %v432
      %v552 = vpack.c.bf16 %v443, %v440
      %v553 = vpack.c.bf16 %v451, %v448
      %v554 = vpack.c.bf16 %v459, %v456
      %v555 = vpack.c.bf16 %v467, %v464
      %v556 = vpack.c.bf16 %v475, %v472
      %v557 = vpack.c.bf16 %v483, %v480
      %v558 = vpack.c.bf16 %v491, %v488
      %v559 = vpack.c.bf16 %v499, %v496
      %v560 = vpack.c.bf16 %v507, %v504
      %v561 = vpack.c.bf16 %v515, %v512
      %v562 = vpack.c.bf16 %v523, %v520
      %v563 = vpack.c.bf16 %v531, %v528
      %v564 = vpack.c.bf16 %v539, %v536
      %v565 = vpack.c.bf16 %v547, %v544
      %v582 = vunpack.c.l.b16 %v550
      %v583 = vunpack.c.h.b16 %v550
      %v584 = vunpack.c.l.b16 %v551
      %v585 = vunpack.c.h.b16 %v551
      %v586 = vunpack.c.l.b16 %v552
      %v587 = vunpack.c.h.b16 %v552
      %v588 = vunpack.c.l.b16 %v553
      %v589 = vunpack.c.h.b16 %v553
      %v590 = vunpack.c.l.b16 %v554
      %v591 = vunpack.c.h.b16 %v554
      %v592 = vunpack.c.l.b16 %v555
      %v593 = vunpack.c.h.b16 %v555
      %v594 = vunpack.c.l.b16 %v556
      %v595 = vunpack.c.h.b16 %v556
      %v596 = vunpack.c.l.b16 %v557
      %v597 = vunpack.c.h.b16 %v557
      %v598 = vunpack.c.l.b16 %v558
      %v599 = vunpack.c.h.b16 %v558
      %v600 = vunpack.c.l.b16 %v559
      %v601 = vunpack.c.h.b16 %v559
      %v602 = vunpack.c.l.b16 %v560
      %v603 = vunpack.c.h.b16 %v560
      %v604 = vunpack.c.l.b16 %v561
      %v605 = vunpack.c.h.b16 %v561
      %v606 = vunpack.c.l.b16 %v562
      %v607 = vunpack.c.h.b16 %v562
      %v608 = vunpack.c.l.b16 %v563
      %v609 = vunpack.c.h.b16 %v563
      %v610 = vunpack.c.l.b16 %v564
      %v611 = vunpack.c.h.b16 %v564
      %v612 = vunpack.c.l.b16 %v565
      %v613 = vunpack.c.h.b16 %v565
      %v614 = vpack.c.b16 %v582, %v582
      %v615 = vpack.c.b16 %v583, %v583
      %v616 = vpack.c.b16 %v584, %v584
      %v617 = vpack.c.b16 %v585, %v585
      %v618 = vpack.c.b16 %v586, %v586
      %v619 = vpack.c.b16 %v587, %v587
      %v620 = vpack.c.b16 %v588, %v588
      %v621 = vpack.c.b16 %v589, %v589
      %v622 = vpack.c.b16 %v590, %v590
      %v623 = vpack.c.b16 %v591, %v591
      %v624 = vpack.c.b16 %v592, %v592
      %v625 = vpack.c.b16 %v593, %v593
      %v626 = vpack.c.b16 %v594, %v594
      %v627 = vpack.c.b16 %v595, %v595
      %v628 = vpack.c.b16 %v596, %v596
      %v629 = vpack.c.b16 %v597, %v597
      %v630 = vpack.c.b16 %v598, %v598
      %v631 = vpack.c.b16 %v599, %v599
      %v632 = vpack.c.b16 %v600, %v600
      %v633 = vpack.c.b16 %v601, %v601
      %v634 = vpack.c.b16 %v602, %v602
      %v635 = vpack.c.b16 %v603, %v603
      %v636 = vpack.c.b16 %v604, %v604
      %v637 = vpack.c.b16 %v605, %v605
      %v638 = vpack.c.b16 %v606, %v606
      %v639 = vpack.c.b16 %v607, %v607
      %v640 = vpack.c.b16 %v608, %v608
      %v641 = vpack.c.b16 %v609, %v609
      %v642 = vpack.c.b16 %v610, %v610
      %v643 = vpack.c.b16 %v611, %v611
      %v644 = vpack.c.b16 %v612, %v612
      %v645 = vpack.c.b16 %v613, %v613
      %vm678 = vcmask 60416
      %679 = vst.msk [vmem:[%s213] sm:$0xf] %vm678, %v614
      %680 = vst.msk [vmem:[%s213 + $0x4] sm:$0xf] %vm678, %v615
      %681 = vst.msk [vmem:[%s213 + $0x10] sm:$0xf] %vm678, %v616
      %682 = vst.msk [vmem:[%s213 + $0x14] sm:$0xf] %vm678, %v617
      %683 = vst.msk [vmem:[%s213 + $0x20] sm:$0xf] %vm678, %v618
      %684 = vst.msk [vmem:[%s213 + $0x24] sm:$0xf] %vm678, %v619
      %685 = vst.msk [vmem:[%s213 + $0x30] sm:$0xf] %vm678, %v620
      %686 = vst.msk [vmem:[%s213 + $0x34] sm:$0xf] %vm678, %v621
      %687 = vst.msk [vmem:[%s213 + $0x40] sm:$0xf] %vm678, %v622
      %688 = vst.msk [vmem:[%s213 + $0x44] sm:$0xf] %vm678, %v623
      %689 = vst.msk [vmem:[%s213 + $0x50] sm:$0xf] %vm678, %v624
      %690 = vst.msk [vmem:[%s213 + $0x54] sm:$0xf] %vm678, %v625
      %691 = vst.msk [vmem:[%s213 + $0x60] sm:$0xf] %vm678, %v626
      %692 = vst.msk [vmem:[%s213 + $0x64] sm:$0xf] %vm678, %v627
      %693 = vst.msk [vmem:[%s213 + $0x70] sm:$0xf] %vm678, %v628
      %694 = vst.msk [vmem:[%s213 + $0x74] sm:$0xf] %vm678, %v629
      %695 = vst.msk [vmem:[%s213 + $0x80] sm:$0xf] %vm678, %v630
      %696 = vst.msk [vmem:[%s213 + $0x84] sm:$0xf] %vm678, %v631
      %697 = vst.msk [vmem:[%s213 + $0x90] sm:$0xf] %vm678, %v632
      %698 = vst.msk [vmem:[%s213 + $0x94] sm:$0xf] %vm678, %v633
      %699 = vst.msk [vmem:[%s213 + $0xa0] sm:$0xf] %vm678, %v634
      %700 = vst.msk [vmem:[%s213 + $0xa4] sm:$0xf] %vm678, %v635
      %701 = vst.msk [vmem:[%s213 + $0xb0] sm:$0xf] %vm678, %v636
      %702 = vst.msk [vmem:[%s213 + $0xb4] sm:$0xf] %vm678, %v637
      %703 = vst.msk [vmem:[%s213 + $0xc0] sm:$0xf] %vm678, %v638
      %704 = vst.msk [vmem:[%s213 + $0xc4] sm:$0xf] %vm678, %v639
      %705 = vst.msk [vmem:[%s213 + $0xd0] sm:$0xf] %vm678, %v640
      %706 = vst.msk [vmem:[%s213 + $0xd4] sm:$0xf] %vm678, %v641
      %707 = vst.msk [vmem:[%s213 + $0xe0] sm:$0xf] %vm678, %v642
      %708 = vst.msk [vmem:[%s213 + $0xe4] sm:$0xf] %vm678, %v643
      %709 = vst.msk [vmem:[%s213 + $0xf0] sm:$0xf] %vm678, %v644
      %710 = vst.msk [vmem:[%s213 + $0xf4] sm:$0xf] %vm678, %v645
      %711 = vrot.lane.b32.xlu0 %v614, 120
      %v712 = vpop.permute.xlu0 %711
      %713 = vrot.lane.b32.xlu0 %v615, 120
      %v714 = vpop.permute.xlu0 %713
      %715 = vrot.lane.b32.xlu0 %v616, 120
      %v716 = vpop.permute.xlu0 %715
      %717 = vrot.lane.b32.xlu0 %v617, 120
      %v718 = vpop.permute.xlu0 %717
      %719 = vrot.lane.b32.xlu0 %v618, 120
      %v720 = vpop.permute.xlu0 %719
      %721 = vrot.lane.b32.xlu0 %v619, 120
      %v722 = vpop.permute.xlu0 %721
      %723 = vrot.lane.b32.xlu0 %v620, 120
      %v724 = vpop.permute.xlu0 %723
      %725 = vrot.lane.b32.xlu0 %v621, 120
      %v726 = vpop.permute.xlu0 %725
      %727 = vrot.lane.b32.xlu0 %v622, 120
      %v728 = vpop.permute.xlu0 %727
      %729 = vrot.lane.b32.xlu0 %v623, 120
      %v730 = vpop.permute.xlu0 %729
      %731 = vrot.lane.b32.xlu0 %v624, 120
      %v732 = vpop.permute.xlu0 %731
      %733 = vrot.lane.b32.xlu0 %v625, 120
      %v734 = vpop.permute.xlu0 %733
      %735 = vrot.lane.b32.xlu0 %v626, 120
      %v736 = vpop.permute.xlu0 %735
      %737 = vrot.lane.b32.xlu0 %v627, 120
      %v738 = vpop.permute.xlu0 %737
      %739 = vrot.lane.b32.xlu0 %v628, 120
      %v740 = vpop.permute.xlu0 %739
      %741 = vrot.lane.b32.xlu0 %v629, 120
      %v742 = vpop.permute.xlu0 %741
      %743 = vrot.lane.b32.xlu0 %v630, 120
      %v744 = vpop.permute.xlu0 %743
      %745 = vrot.lane.b32.xlu0 %v631, 120
      %v746 = vpop.permute.xlu0 %745
      %747 = vrot.lane.b32.xlu0 %v632, 120
      %v748 = vpop.permute.xlu0 %747
      %749 = vrot.lane.b32.xlu0 %v633, 120
      %v750 = vpop.permute.xlu0 %749
      %751 = vrot.lane.b32.xlu0 %v634, 120
      %v752 = vpop.permute.xlu0 %751
      %753 = vrot.lane.b32.xlu0 %v635, 120
      %v754 = vpop.permute.xlu0 %753
      %755 = vrot.lane.b32.xlu0 %v636, 120
      %v756 = vpop.permute.xlu0 %755
      %757 = vrot.lane.b32.xlu0 %v637, 120
      %v758 = vpop.permute.xlu0 %757
      %759 = vrot.lane.b32.xlu0 %v638, 120
      %v760 = vpop.permute.xlu0 %759
      %761 = vrot.lane.b32.xlu0 %v639, 120
      %v762 = vpop.permute.xlu0 %761
      %763 = vrot.lane.b32.xlu0 %v640, 120
      %v764 = vpop.permute.xlu0 %763
      %765 = vrot.lane.b32.xlu0 %v641, 120
      %v766 = vpop.permute.xlu0 %765
      %767 = vrot.lane.b32.xlu0 %v642, 120
      %v768 = vpop.permute.xlu0 %767
      %769 = vrot.lane.b32.xlu0 %v643, 120
      %v770 = vpop.permute.xlu0 %769
      %771 = vrot.lane.b32.xlu0 %v644, 120
      %v772 = vpop.permute.xlu0 %771
      %773 = vrot.lane.b32.xlu0 %v645, 120
      %v774 = vpop.permute.xlu0 %773
      %s807 = scalar_lea.vmem %s213, 8
      %808 = vst.msk [vmem:[%s807] sm:$0xf] %vm678, %v712
      %809 = vst.msk [vmem:[%s807 + $0x4] sm:$0xf] %vm678, %v714
      %810 = vst.msk [vmem:[%s807 + $0x10] sm:$0xf] %vm678, %v716
      %811 = vst.msk [vmem:[%s807 + $0x14] sm:$0xf] %vm678, %v718
      %812 = vst.msk [vmem:[%s807 + $0x20] sm:$0xf] %vm678, %v720
      %813 = vst.msk [vmem:[%s807 + $0x24] sm:$0xf] %vm678, %v722
      %814 = vst.msk [vmem:[%s807 + $0x30] sm:$0xf] %vm678, %v724
      %815 = vst.msk [vmem:[%s807 + $0x34] sm:$0xf] %vm678, %v726
      %816 = vst.msk [vmem:[%s807 + $0x40] sm:$0xf] %vm678, %v728
      %817 = vst.msk [vmem:[%s807 + $0x44] sm:$0xf] %vm678, %v730
      %818 = vst.msk [vmem:[%s807 + $0x50] sm:$0xf] %vm678, %v732
      %819 = vst.msk [vmem:[%s807 + $0x54] sm:$0xf] %vm678, %v734
      %820 = vst.msk [vmem:[%s807 + $0x60] sm:$0xf] %vm678, %v736
      %821 = vst.msk [vmem:[%s807 + $0x64] sm:$0xf] %vm678, %v738
      %822 = vst.msk [vmem:[%s807 + $0x70] sm:$0xf] %vm678, %v740
      %823 = vst.msk [vmem:[%s807 + $0x74] sm:$0xf] %vm678, %v742
      %824 = vst.msk [vmem:[%s807 + $0x80] sm:$0xf] %vm678, %v744
      %825 = vst.msk [vmem:[%s807 + $0x84] sm:$0xf] %vm678, %v746
      %826 = vst.msk [vmem:[%s807 + $0x90] sm:$0xf] %vm678, %v748
      %827 = vst.msk [vmem:[%s807 + $0x94] sm:$0xf] %vm678, %v750
      %828 = vst.msk [vmem:[%s807 + $0xa0] sm:$0xf] %vm678, %v752
      %829 = vst.msk [vmem:[%s807 + $0xa4] sm:$0xf] %vm678, %v754
      %830 = vst.msk [vmem:[%s807 + $0xb0] sm:$0xf] %vm678, %v756
      %831 = vst.msk [vmem:[%s807 + $0xb4] sm:$0xf] %vm678, %v758
      %832 = vst.msk [vmem:[%s807 + $0xc0] sm:$0xf] %vm678, %v760
      %833 = vst.msk [vmem:[%s807 + $0xc4] sm:$0xf] %vm678, %v762
      %834 = vst.msk [vmem:[%s807 + $0xd0] sm:$0xf] %vm678, %v764
      %835 = vst.msk [vmem:[%s807 + $0xd4] sm:$0xf] %vm678, %v766
      %836 = vst.msk [vmem:[%s807 + $0xe0] sm:$0xf] %vm678, %v768
      %837 = vst.msk [vmem:[%s807 + $0xe4] sm:$0xf] %vm678, %v770
      %838 = vst.msk [vmem:[%s807 + $0xf0] sm:$0xf] %vm678, %v772
      %839 = vst.msk [vmem:[%s807 + $0xf4] sm:$0xf] %vm678, %v774
      %s840 = smul.u32 16, %s19
      %p841 = scmp.lt.s32.totalorder %s18, 1
      %s842 = scalar_select %p841, %s18, 1
      %p843 = scmp.lt.s32.totalorder %s840, 15
      %s844 = scalar_select %p843, %s840, 15
      %s845 = smul.addr %s844, 4
      %s846 = smul.addr %s842, 64
      %s847 = sadd.s32 %s845, %s846
      %s848 = smul.addr %s847, 4
      %s849 = scalar_lea.vmem %s3, %s848
      // Predicated region
      $region33: #{tpu_custom_call.1} parent=31 // pred_check
        %p850 = pneg %p116
      $region34: #{tpu_custom_call.1} parent=31 // pred_check_branch
        %852 = sbr.rel (%p850) target = $region36
      $region35: #{tpu_custom_call.1} parent=31 // pred_region
        %s853 = smul.u32 16, %s19
      $region36: #{tpu_custom_call.1} parent=31 // pred_fallthru
        _
    $region32: #{tpu_custom_call.1} parent=5 // pred_fallthru
      _
    %p854 = scmp.le.s32.totalorder 2, %s9
    // Predicated region
    $region37: #{tpu_custom_call.1} parent=5 // pred_check
      %p855 = pneg %p854
    $region38: #{tpu_custom_call.1} parent=5 // pred_check_branch
      %857 = sbr.rel (%p855) target = $region40
    $region39: #{tpu_custom_call.1} parent=5 // pred_region
      %s858 = ssub.s32 %s9, 2
      // Predicated region
      $region41: #{tpu_custom_call.1} parent=39 // pred_check
        %p859 = pneg %p122
      $region42: #{tpu_custom_call.1} parent=39 // pred_check_branch
        %861 = sbr.rel (%p859) target = $region44
      $region43: #{tpu_custom_call.1} parent=39 // pred_region
        %s862 = smul.u32 16, %s21
        %p863 = scmp.lt.s32.totalorder %s20, 1
        %s864 = scalar_select %p863, %s20, 1
        %p865 = scmp.lt.s32.totalorder %s862, 15
        %s866 = scalar_select %p865, %s862, 15
        %s867 = smul.addr %s866, 4
        %s868 = smul.addr %s864, 64
        %s869 = sadd.s32 %s867, %s868
        %s870 = smul.addr %s869, 4
        %s871 = scalar_lea.vmem %s3, %s870
      $region44: #{tpu_custom_call.1} parent=39 // pred_fallthru
        _
    $region40: #{tpu_custom_call.1} parent=5 // pred_fallthru
      _
  $region6: #{tpu_custom_call.1} parent=0 // loop_footer
    %s13 = sadd.s32 1, %s9
  $region7: #{tpu_custom_call.1} parent=0 // loop_footer_branch
    %8 = sbr.rel target = $region3
  $region8: #{tpu_custom_call.1} parent=0 // loop_exit
    _

</llo_original>
